<compile_context>
chip_gen: v7x
topology: tpu7x:2x2x1
jax: 0.10.0
libtpu: 0.0.40
codegen_flags: <defaults>
</compile_context>

<pallas_src>
import jax
import jax.numpy as jnp
from jax.experimental import pallas as pl
from jax.experimental.pallas import tpu as pltpu

# Per-grid-step VMEM budget: leaves headroom under the 16 MiB v5e default
# scoped-VMEM limit (also safe on v6e/v7x defaults).
_VMEM_STEP_BUDGET = 12 * 1024 * 1024


def _step_vmem_bytes(tile_b, tile_t, C, mel_itemsize, gate_itemsize):
    # 3 mel input streams + 2 gate streams, each double-buffered by the
    # BlockSpec pipeline, plus the f32 accumulators (single-buffered scratch).
    inputs = 2 * tile_b * tile_t * (3 * C * mel_itemsize + 2 * gate_itemsize)
    accs = tile_b * tile_t * (C + 1) * 4
    return inputs + accs


def _choose_tile_t(B, C, T, mel_itemsize, gate_itemsize):
    # Full T if a single time tile fits the budget; otherwise the largest
    # power-of-two multiple of 128 that fits (keeps the (8,128) lane rule).
    if _step_vmem_bytes(1, T, C, mel_itemsize, gate_itemsize) <= _VMEM_STEP_BUDGET:
        return T
    tile_t = 128
    while (tile_t * 2 < T and
           _step_vmem_bytes(1, tile_t * 2, C, mel_itemsize, gate_itemsize)
           <= _VMEM_STEP_BUDGET):
        tile_t *= 2
    return tile_t


def _choose_tile_b(B, C, tile_t, mel_itemsize, gate_itemsize):
    # Largest divisor of B that is layout-safe for the (tile_b, tile_t) gate
    # block (1, a multiple of 8, or the full batch) and fits the budget.
    best = 1
    for d in range(1, B + 1):
        if B % d != 0:
            continue
        if not (d == 1 or d == B or d % 8 == 0):
            continue
        if _step_vmem_bytes(d, tile_t, C, mel_itemsize, gate_itemsize) <= _VMEM_STEP_BUDGET:
            best = max(best, d)
    return best


def _make_loss_kernel(tile_b, tile_t, total_t, n_mel_elems, n_gate_elems,
                      needs_tail_mask):
    inv_mel = 1.0 / float(n_mel_elems)
    inv_gate = 1.0 / float(n_gate_elems)

    def kernel(post_ref, mel_ref, tgt_ref, gate_out_ref, gate_tgt_ref,
               out_ref, acc_mse_ref, acc_bce_ref):
        b = pl.program_id(0)
        t = pl.program_id(1)
        is_first = jnp.logical_and(b == 0, t == 0)
        is_last = jnp.logical_and(b == pl.num_programs(0) - 1,
                                  t == pl.num_programs(1) - 1)

        @pl.when(is_first)
        def _():
            acc_mse_ref[...] = jnp.zeros_like(acc_mse_ref)
            acc_bce_ref[...] = jnp.zeros_like(acc_bce_ref)

        gate_tgt = gate_tgt_ref[...].astype(jnp.float32)   # (tile_b, tile_t), 0/1
        x = gate_out_ref[...].astype(jnp.float32)          # (tile_b, tile_t)
        tgt = tgt_ref[...].astype(jnp.float32)             # (tile_b, C, tile_t)
        mel = mel_ref[...].astype(jnp.float32)
        post = post_ref[...].astype(jnp.float32)

        # Hoisted mask broadcast: one (tile_b,1,T)->(tile_b,C,T) broadcast
        # shared by both masked-fill terms.
        keep = jnp.broadcast_to((gate_tgt != 0.0)[:, None, :], tgt.shape)
        d_mel = jnp.where(keep, mel, 0.0) - tgt
        d_post = jnp.where(keep, post, 0.0) - tgt
        sq = d_mel * d_mel + d_post * d_post                # (tile_b, C, tile_t)

        # Numerically stable BCE-with-logits: max(x,0) - x*z + log1p(exp(-|x|)).
        bce = (jnp.maximum(x, 0.0) - x * gate_tgt
               + jnp.log1p(jnp.exp(-jnp.abs(x))))           # (tile_b, tile_t)

        if needs_tail_mask:
            lane = jax.lax.broadcasted_iota(jnp.int32, (1, tile_t), 1)
            valid = (t * tile_t + lane) < total_t           # (1, tile_t)
            sq = jnp.where(valid[:, None, :], sq, 0.0)
            bce = jnp.where(valid, bce, 0.0)

        # Elementwise vector accumulation only (VALU); no per-step XLU reduce.
        acc_mse_ref[...] += sq
        acc_bce_ref[...] += bce

        @pl.when(is_last)
        def _():
            total = (jnp.sum(acc_mse_ref[...]) * inv_mel
                     + jnp.sum(acc_bce_ref[...]) * inv_gate)
            out_ref[...] = jnp.zeros_like(out_ref) + total

    return kernel


def tacotron2_loss(postnet_mel_out, mel_out, mel_target, gate_out, gate_target,
                   *, tile_t=None, tile_b=None):
    """postnet_mel_out / mel_out / mel_target: (B, C, T); gate_out / gate_target: (B, T)."""
    B, C, T = mel_out.shape
    assert postnet_mel_out.shape == (B, C, T) and mel_target.shape == (B, C, T)
    assert gate_out.shape == (B, T) and gate_target.shape == (B, T)

    # Mel streams stay in their native dtype (bf16 stays bf16 over HBM).
    # Only booleans get a (tiny) host-side numeric cast.
    if gate_target.dtype == jnp.bool_:
        gate_target = gate_target.astype(jnp.float32)
    if gate_out.dtype == jnp.bool_:
        gate_out = gate_out.astype(jnp.float32)

    mel_itemsize = jnp.dtype(mel_out.dtype).itemsize
    gate_itemsize = jnp.dtype(gate_out.dtype).itemsize

    if tile_t is None:
        tile_t = _choose_tile_t(B, C, T, mel_itemsize, gate_itemsize)
    if tile_b is None:
        tile_b = _choose_tile_b(B, C, tile_t, mel_itemsize, gate_itemsize)
    assert B % tile_b == 0, (B, tile_b)

    num_b = B // tile_b
    num_t = pl.cdiv(T, tile_t)
    needs_tail_mask = (T % tile_t) != 0

    n_mel_elems = B * C * T
    n_gate_elems = B * T
    kernel = _make_loss_kernel(tile_b, tile_t, T, n_mel_elems, n_gate_elems,
                               needs_tail_mask)

    mel_spec = pl.BlockSpec((tile_b, C, tile_t), lambda b, t: (b, 0, t))
    gate_spec = pl.BlockSpec((tile_b, tile_t), lambda b, t: (b, t))

    out = pl.pallas_call(
        kernel,
        out_shape=jax.ShapeDtypeStruct((1, 1), jnp.float32),
        grid_spec=pltpu.PrefetchScalarGridSpec(
            num_scalar_prefetch=0,
            grid=(num_b, num_t),
            in_specs=[
                mel_spec,    # postnet_mel_out
                mel_spec,    # mel_out
                mel_spec,    # mel_target
                gate_spec,   # gate_out
                gate_spec,   # gate_target
            ],
            out_specs=pl.BlockSpec((1, 1), lambda b, t: (0, 0)),
            scratch_shapes=[
                pltpu.VMEM((tile_b, C, tile_t), jnp.float32),  # mel+postnet SSE partials
                pltpu.VMEM((tile_b, tile_t), jnp.float32),     # BCE partials
            ],
        ),
        compiler_params=pltpu.CompilerParams(
            dimension_semantics=("arbitrary", "arbitrary")),
    )(postnet_mel_out, mel_out, mel_target, gate_out, gate_target)
    return out[0, 0]


def _reference_loss(postnet_mel_out, mel_out, mel_target, gate_out, gate_target):
    keep = (gate_target != 0)[:, None, :]
    tgt = mel_target.astype(jnp.float32)
    mel_m = jnp.where(keep, mel_out.astype(jnp.float32), 0.0)
    post_m = jnp.where(keep, postnet_mel_out.astype(jnp.float32), 0.0)
    mse1 = jnp.mean((mel_m - tgt) ** 2)
    mse2 = jnp.mean((post_m - tgt) ** 2)
    x = gate_out.astype(jnp.float32)
    z = gate_target.astype(jnp.float32)
    bce = jnp.mean(jnp.maximum(x, 0.0) - x * z + jnp.log1p(jnp.exp(-jnp.abs(x))))
    return mse1 + mse2 + bce


if __name__ == "__main__":
    def make_inputs(key, B, C, T, mel_dtype=jnp.float32):
        k1, k2, k3, k4, k5 = jax.random.split(key, 5)
        return (jax.random.normal(k1, (B, C, T)).astype(mel_dtype),   # postnet_mel_out
                jax.random.normal(k2, (B, C, T)).astype(mel_dtype),   # mel_out
                jax.random.normal(k3, (B, C, T)).astype(mel_dtype),   # mel_target
                jax.random.normal(k4, (B, T), dtype=jnp.float32),     # gate_out
                (jax.random.uniform(k5, (B, T)) > 0.5).astype(jnp.float32))  # gate_target

    # Case 1: small single-tile case (batch=2, n_mel_channels=8, time=16).
    args1 = make_inputs(jax.random.PRNGKey(0), 2, 8, 16)
    loss1 = jax.block_until_ready(tacotron2_loss(*args1))
    ref1 = _reference_loss(*args1)
    assert jnp.allclose(loss1, ref1, rtol=1e-4, atol=1e-5), (loss1, ref1)

    # Case 2: exercises time tiling + partial-final-tile masking (T=300, tile_t=128).
    args2 = make_inputs(jax.random.PRNGKey(1), 2, 8, 300)
    loss2 = jax.block_until_ready(tacotron2_loss(*args2, tile_t=128))
    ref2 = _reference_loss(*args2)
    assert jnp.allclose(loss2, ref2, rtol=1e-4, atol=1e-5), (loss2, ref2)

    # Case 3: bf16 mel streams + multi-row batch tile (tile_b > 1 path).
    args3 = make_inputs(jax.random.PRNGKey(2), 4, 8, 300, mel_dtype=jnp.bfloat16)
    loss3 = jax.block_until_ready(tacotron2_loss(*args3))
    ref3 = _reference_loss(*args3)
    assert jnp.allclose(loss3, ref3, rtol=1e-4, atol=1e-5), (loss3, ref3)

    print("KERNEL_OK")
</pallas_src>

<mosaic_0001>
module attributes {stable_mosaic.version = 11 : i64} {
  func.func @kernel(%arg0: i32, %arg1: i32, %arg2: memref<2x8x16xf32, #tpu.memory_space<vmem>>, %arg3: memref<2x8x16xf32, #tpu.memory_space<vmem>>, %arg4: memref<2x8x16xf32, #tpu.memory_space<vmem>>, %arg5: memref<2x16xf32, #tpu.memory_space<vmem>>, %arg6: memref<2x16xf32, #tpu.memory_space<vmem>>, %arg7: memref<1x1xf32, #tpu.memory_space<vmem>>, %arg8: memref<2x8x16xf32, #tpu.memory_space<vmem>>, %arg9: memref<2x16xf32, #tpu.memory_space<vmem>>) attributes {dimension_semantics = [#tpu.dimension_semantics<arbitrary>, #tpu.dimension_semantics<arbitrary>], iteration_bounds = array<i64: 1, 1>, scalar_prefetch = 0 : i64, scratch_operands = 2 : i64, tpu.core_type = #tpu.core_type<tc>, window_params = [{transform_indices = @transform_0, window_bounds = array<i64: 2, 8, 16>}, {transform_indices = @transform_1, window_bounds = array<i64: 2, 8, 16>}, {transform_indices = @transform_2, window_bounds = array<i64: 2, 8, 16>}, {transform_indices = @transform_3, window_bounds = array<i64: 2, 16>}, {transform_indices = @transform_4, window_bounds = array<i64: 2, 16>}, {pipeline_mode = #tpu.pipeline_mode<synchronous>, transform_indices = @transform_5, window_bounds = array<i64: 1, 1>}]} {
    %c0_i32 = arith.constant 0 : i32
    %0 = arith.cmpi eq, %arg0, %c0_i32 : i32
    %c0_i32_0 = arith.constant 0 : i32
    %1 = arith.cmpi eq, %arg1, %c0_i32_0 : i32
    %2 = arith.andi %0, %1 : i1
    %c0_i32_1 = arith.constant 0 : i32
    %3 = arith.cmpi eq, %arg0, %c0_i32_1 : i32
    %c0_i32_2 = arith.constant 0 : i32
    %4 = arith.cmpi eq, %arg1, %c0_i32_2 : i32
    %5 = arith.andi %3, %4 : i1
    %6 = arith.extui %2 : i1 to i32
    %c0_i32_3 = arith.constant 0 : i32
    %7 = arith.cmpi ne, %6, %c0_i32_3 : i32
    scf.if %7 {
      %cst_31 = arith.constant 0.000000e+00 : f32
      %45 = vector.broadcast %cst_31 : f32 to vector<2x8x16xf32>
      %c0_32 = arith.constant 0 : index
      %c0_33 = arith.constant 0 : index
      %c0_34 = arith.constant 0 : index
      %46 = vector.load %arg8[%c0_32, %c0_33, %c0_34] : memref<2x8x16xf32, #tpu.memory_space<vmem>>, vector<2x8x16xf32>
      tpu.vector_store %arg8[%c0_32, %c0_33, %c0_34], %45 {strides = array<i32>} : memref<2x8x16xf32, #tpu.memory_space<vmem>>, vector<2x8x16xf32>,
      %cst_35 = arith.constant 0.000000e+00 : f32
      %47 = vector.broadcast %cst_35 : f32 to vector<2x16xf32>
      %c0_36 = arith.constant 0 : index
      %c0_37 = arith.constant 0 : index
      %48 = vector.load %arg9[%c0_36, %c0_37] : memref<2x16xf32, #tpu.memory_space<vmem>>, vector<2x16xf32>
      tpu.vector_store %arg9[%c0_36, %c0_37], %47 {strides = array<i32>} : memref<2x16xf32, #tpu.memory_space<vmem>>, vector<2x16xf32>,
    } else {
    }
    %c0 = arith.constant 0 : index
    %c0_4 = arith.constant 0 : index
    %8 = vector.load %arg6[%c0, %c0_4] : memref<2x16xf32, #tpu.memory_space<vmem>>, vector<2x16xf32>
    %c0_5 = arith.constant 0 : index
    %c0_6 = arith.constant 0 : index
    %9 = vector.load %arg5[%c0_5, %c0_6] : memref<2x16xf32, #tpu.memory_space<vmem>>, vector<2x16xf32>
    %c0_7 = arith.constant 0 : index
    %c0_8 = arith.constant 0 : index
    %c0_9 = arith.constant 0 : index
    %10 = vector.load %arg4[%c0_7, %c0_8, %c0_9] : memref<2x8x16xf32, #tpu.memory_space<vmem>>, vector<2x8x16xf32>
    %c0_10 = arith.constant 0 : index
    %c0_11 = arith.constant 0 : index
    %c0_12 = arith.constant 0 : index
    %11 = vector.load %arg3[%c0_10, %c0_11, %c0_12] : memref<2x8x16xf32, #tpu.memory_space<vmem>>, vector<2x8x16xf32>
    %c0_13 = arith.constant 0 : index
    %c0_14 = arith.constant 0 : index
    %c0_15 = arith.constant 0 : index
    %12 = vector.load %arg2[%c0_13, %c0_14, %c0_15] : memref<2x8x16xf32, #tpu.memory_space<vmem>>, vector<2x8x16xf32>
    %cst = arith.constant 0.000000e+00 : f32
    %13 = vector.broadcast %cst : f32 to vector<2x16xf32>
    %14 = arith.cmpf one, %8, %13 : vector<2x16xf32>
    %15 = vector.shape_cast %14 : vector<2x16xi1> to vector<2x1x16xi1>
    %16 = vector.shape_cast %15 : vector<2x1x16xi1> to vector<2x1x16xi1>
    %17 = vector.broadcast %16 : vector<2x1x16xi1> to vector<2x8x16xi1>
    %cst_16 = arith.constant 0.000000e+00 : f32
    %18 = vector.broadcast %cst_16 : f32 to vector<2x8x16xf32>
    %19 = arith.select %17, %11, %18 : vector<2x8x16xi1>, vector<2x8x16xf32>
    %20 = arith.subf %19, %10 : vector<2x8x16xf32>
    %cst_17 = arith.constant 0.000000e+00 : f32
    %21 = vector.broadcast %cst_17 : f32 to vector<2x8x16xf32>
    %22 = arith.select %17, %12, %21 : vector<2x8x16xi1>, vector<2x8x16xf32>
    %23 = arith.subf %22, %10 : vector<2x8x16xf32>
    %24 = arith.mulf %20, %20 : vector<2x8x16xf32>
    %25 = arith.mulf %23, %23 : vector<2x8x16xf32>
    %26 = arith.addf %24, %25 : vector<2x8x16xf32>
    %cst_18 = arith.constant 0.000000e+00 : f32
    %27 = vector.broadcast %cst_18 : f32 to vector<2x16xf32>
    %28 = arith.maximumf %9, %27 : vector<2x16xf32>
    %29 = arith.mulf %9, %8 : vector<2x16xf32>
    %30 = arith.subf %28, %29 : vector<2x16xf32>
    %31 = math.absf %9 : vector<2x16xf32>
    %cst_19 = arith.constant 0.000000e+00 : f32
    %32 = vector.broadcast %cst_19 : f32 to vector<2x16xf32>
    %33 = arith.subf %32, %31 : vector<2x16xf32>
    %34 = math.exp %33 : vector<2x16xf32>
    %35 = math.log1p %34 : vector<2x16xf32>
    %36 = arith.addf %30, %35 : vector<2x16xf32>
    %c0_20 = arith.constant 0 : index
    %c0_21 = arith.constant 0 : index
    %c0_22 = arith.constant 0 : index
    %37 = vector.load %arg8[%c0_20, %c0_21, %c0_22] : memref<2x8x16xf32, #tpu.memory_space<vmem>>, vector<2x8x16xf32>
    %38 = arith.addf %37, %26 : vector<2x8x16xf32>
    %c0_23 = arith.constant 0 : index
    %c0_24 = arith.constant 0 : index
    %c0_25 = arith.constant 0 : index
    %39 = vector.load %arg8[%c0_23, %c0_24, %c0_25] : memref<2x8x16xf32, #tpu.memory_space<vmem>>, vector<2x8x16xf32>
    tpu.vector_store %arg8[%c0_23, %c0_24, %c0_25], %38 {strides = array<i32>} : memref<2x8x16xf32, #tpu.memory_space<vmem>>, vector<2x8x16xf32>,
    %c0_26 = arith.constant 0 : index
    %c0_27 = arith.constant 0 : index
    %40 = vector.load %arg9[%c0_26, %c0_27] : memref<2x16xf32, #tpu.memory_space<vmem>>, vector<2x16xf32>
    %41 = arith.addf %40, %36 : vector<2x16xf32>
    %c0_28 = arith.constant 0 : index
    %c0_29 = arith.constant 0 : index
    %42 = vector.load %arg9[%c0_28, %c0_29] : memref<2x16xf32, #tpu.memory_space<vmem>>, vector<2x16xf32>
    tpu.vector_store %arg9[%c0_28, %c0_29], %41 {strides = array<i32>} : memref<2x16xf32, #tpu.memory_space<vmem>>, vector<2x16xf32>,
    %43 = arith.extui %5 : i1 to i32
    %c0_i32_30 = arith.constant 0 : i32
    %44 = arith.cmpi ne, %43, %c0_i32_30 : i32
    scf.if %44 {
      %c0_31 = arith.constant 0 : index
      %c0_32 = arith.constant 0 : index
      %c0_33 = arith.constant 0 : index
      %45 = vector.load %arg8[%c0_31, %c0_32, %c0_33] : memref<2x8x16xf32, #tpu.memory_space<vmem>>, vector<2x8x16xf32>
      %46 = vector.shape_cast %45 : vector<2x8x16xf32> to vector<1x2x8x16xf32>
      %cst_34 = arith.constant dense<0.000000e+00> : vector<1xf32>
      %47 = vector.multi_reduction <add>, %46, %cst_34 [1, 2, 3] : vector<1x2x8x16xf32> to vector<1xf32>
      %48 = vector.shape_cast %47 : vector<1xf32> to vector<1x1x1x1xf32>
      %49 = vector.extract %48[0, 0, 0, 0] : f32 from vector<1x1x1x1xf32>
      %cst_35 = arith.constant 3.906250e-03 : f32
      %50 = arith.mulf %49, %cst_35 : f32
      %c0_36 = arith.constant 0 : index
      %c0_37 = arith.constant 0 : index
      %51 = vector.load %arg9[%c0_36, %c0_37] : memref<2x16xf32, #tpu.memory_space<vmem>>, vector<2x16xf32>
      %52 = vector.shape_cast %51 : vector<2x16xf32> to vector<1x2x16xf32>
      %cst_38 = arith.constant dense<0.000000e+00> : vector<1xf32>
      %53 = vector.multi_reduction <add>, %52, %cst_38 [1, 2] : vector<1x2x16xf32> to vector<1xf32>
      %54 = vector.shape_cast %53 : vector<1xf32> to vector<1x1x1xf32>
      %55 = vector.extract %54[0, 0, 0] : f32 from vector<1x1x1xf32>
      %cst_39 = arith.constant 3.125000e-02 : f32
      %56 = arith.mulf %55, %cst_39 : f32
      %57 = arith.addf %50, %56 : f32
      %cst_40 = arith.constant 0.000000e+00 : f32
      %58 = vector.broadcast %cst_40 : f32 to vector<1x1xf32>
      %59 = vector.broadcast %57 : f32 to vector<1x1xf32>
      %60 = arith.addf %58, %59 : vector<1x1xf32>
      %c0_41 = arith.constant 0 : index
      %c0_42 = arith.constant 0 : index
      %61 = vector.load %arg7[%c0_41, %c0_42] : memref<1x1xf32, #tpu.memory_space<vmem>>, vector<1x1xf32>
      tpu.vector_store %arg7[%c0_41, %c0_42], %60 {strides = array<i32>} : memref<1x1xf32, #tpu.memory_space<vmem>>, vector<1x1xf32>,
    } else {
    }
    return
  }
  func.func @transform_0(%arg0: i32, %arg1: i32) -> (i32, i32, i32) {
    %c0_i32 = arith.constant 0 : i32
    %c0_i32_0 = arith.constant 0 : i32
    return %arg0, %c0_i32, %arg1 : i32, i32, i32
  }
  func.func @transform_1(%arg0: i32, %arg1: i32) -> (i32, i32, i32) {
    %c0_i32 = arith.constant 0 : i32
    %c0_i32_0 = arith.constant 0 : i32
    return %arg0, %c0_i32, %arg1 : i32, i32, i32
  }
  func.func @transform_2(%arg0: i32, %arg1: i32) -> (i32, i32, i32) {
    %c0_i32 = arith.constant 0 : i32
    %c0_i32_0 = arith.constant 0 : i32
    return %arg0, %c0_i32, %arg1 : i32, i32, i32
  }
  func.func @transform_3(%arg0: i32, %arg1: i32) -> (i32, i32) {
    %c0_i32 = arith.constant 0 : i32
    return %arg0, %arg1 : i32, i32
  }
  func.func @transform_4(%arg0: i32, %arg1: i32) -> (i32, i32) {
    %c0_i32 = arith.constant 0 : i32
    return %arg0, %arg1 : i32, i32
  }
  func.func @transform_5(%arg0: i32, %arg1: i32) -> (i32, i32) {
    %c0_i32 = arith.constant 0 : i32
    %c0_i32_0 = arith.constant 0 : i32
    %c0_i32_1 = arith.constant 0 : i32
    return %c0_i32, %c0_i32_0 : i32, i32
  }
}

</mosaic_0001>

<llo_original>
// kernel: tpu_custom_call.1
$region0: #{tpu_custom_call.1}
  #allocation0 [shape = 'u32[]', space=smem, size = 0x4, offset = 0x4, fixed_abs, tag = 'smem constant byte address 0x4 - core index']
  #allocation1 [shape = 'u32[144,128]{1,0:T(1,128)}', space=vmem, size = 0x12000, scoped, tag = 'internal scratch']
  #allocation2 [shape = 'f32[2,8,16]{2,1,0:T(8,128)}', space=vmem, size = 0x2000, scoped, tag = 'scratch operand']
  #allocation3 [shape = 'f32[2,16]{1,0:T(2,128)}', space=vmem, size = 0x400, scoped, tag = 'scratch operand']
  %s0 = inlined_call_operand.hbm [shape: f32[2,8,16], index: 0, kind: input, shape index: {}]
  %s1 = inlined_call_operand.hbm [shape: f32[2,8,16], index: 1, kind: input, shape index: {}]
  %s2 = inlined_call_operand.hbm [shape: f32[2,8,16], index: 2, kind: input, shape index: {}]
  %s3 = inlined_call_operand.vmem [shape: f32[2,16], index: 3, kind: input, shape index: {}]
  %s4 = inlined_call_operand.vmem [shape: f32[2,16], index: 4, kind: input, shape index: {}]
  %s5 = inlined_call_operand.hbm [shape: f32[1,1], index: 5, kind: output, shape index: {}]
  %s6 = sld [smem:[#allocation0]]
  $region50: #{tpu_custom_call.1} parent=0
    _
  %s8 = ssub.s32 1, %s6
  %s9 = scalar_select 0, %s8, %s6
  $region1: #{tpu_custom_call.1} parent=0
    #allocation4 [shape = 'u8[8192]{0}', space=vmem, size = 0x2000, scoped, tag = 'input window, operand 0, single buffered']
    #allocation5 [shape = 's32[1]{0}', space=sflag, size = 0x4, scoped, tag = 'scoped memory for tpu_custom_call.1']
    #allocation6 [shape = 's32[1]{0}', space=sflag, size = 0x4, scoped, tag = 'scoped memory for tpu_custom_call.1']
    #allocation7 [shape = 'u8[8192]{0}', space=vmem, size = 0x2000, scoped, tag = 'input window, operand 1, single buffered']
    #allocation8 [shape = 's32[1]{0}', space=sflag, size = 0x4, scoped, tag = 'scoped memory for tpu_custom_call.1']
    #allocation9 [shape = 'u8[8192]{0}', space=vmem, size = 0x2000, scoped, tag = 'input window, operand 2, single buffered']
    #allocation10 [shape = 'u8[512]{0}', space=vmem, size = 0x400, scoped, tag = 'output window, operand 0, single buffered']
    %10 = vsyncpa [#allocation5], 0
    %11 = vsyncpa [#allocation8], 0
    %12 = vsyncpa [#allocation6], 0
    // Predicated region
    $region2: #{tpu_custom_call.1} parent=1 // pred_check
      _
    $region3: #{tpu_custom_call.1} parent=1 // pred_check_branch
      %14 = sbr.rel (0) target = $region5
    $region4: #{tpu_custom_call.1} parent=1 // pred_region
      %s16 = ssub.s32 256, 256
      %17 = vsyncadd [#allocation5], %s16
      %s18 = sshll.u32 [#allocation4], 4
      %s19 = int_to_ptr.vmem [resolvable:$true] %s18
      %24 = dma.hbm_to_vmem [thread:$0]  %s0, 256, %s19, [#allocation5], 128, 128, 8
    $region5: #{tpu_custom_call.1} parent=1 // pred_fallthru
      _
    // Predicated region
    $region6: #{tpu_custom_call.1} parent=1 // pred_check
      _
    $region7: #{tpu_custom_call.1} parent=1 // pred_check_branch
      %26 = sbr.rel (0) target = $region9
    $region8: #{tpu_custom_call.1} parent=1 // pred_region
      %s28 = ssub.s32 256, 256
      %29 = vsyncadd [#allocation8], %s28
      %s30 = sshll.u32 [#allocation7], 4
      %s31 = int_to_ptr.vmem [resolvable:$true] %s30
      %36 = dma.hbm_to_vmem [thread:$0]  %s1, 256, %s31, [#allocation8], 128, 128, 8
    $region9: #{tpu_custom_call.1} parent=1 // pred_fallthru
      _
    // Predicated region
    $region10: #{tpu_custom_call.1} parent=1 // pred_check
      _
    $region11: #{tpu_custom_call.1} parent=1 // pred_check_branch
      %38 = sbr.rel (0) target = $region13
    $region12: #{tpu_custom_call.1} parent=1 // pred_region
      %s40 = ssub.s32 256, 256
      %41 = vsyncadd [#allocation8], %s40
      %s42 = sshll.u32 [#allocation9], 4
      %s43 = int_to_ptr.vmem [resolvable:$true] %s42
      %48 = dma.hbm_to_vmem [thread:$0]  %s2, 256, %s43, [#allocation8], 128, 128, 8
    $region13: #{tpu_custom_call.1} parent=1 // pred_fallthru
      _
    // Predicated region
    $region14: #{tpu_custom_call.1} parent=1 // pred_check
      _
    $region15: #{tpu_custom_call.1} parent=1 // pred_check_branch
      %50 = sbr.rel (0) target = $region17
    $region16: #{tpu_custom_call.1} parent=1 // pred_region
      _
    $region17: #{tpu_custom_call.1} parent=1 // pred_fallthru
      _
    // Predicated region
    $region18: #{tpu_custom_call.1} parent=1 // pred_check
      _
    $region19: #{tpu_custom_call.1} parent=1 // pred_check_branch
      %52 = sbr.rel (0) target = $region21
    $region20: #{tpu_custom_call.1} parent=1 // pred_region
      _
    $region21: #{tpu_custom_call.1} parent=1 // pred_fallthru
      _
    // Predicated region
    $region22: #{tpu_custom_call.1} parent=1 // pred_check
      _
    $region23: #{tpu_custom_call.1} parent=1 // pred_check_branch
      %54 = sbr.rel (0) target = $region25
    $region24: #{tpu_custom_call.1} parent=1 // pred_region
      %55 = dma.done [#allocation5], 256
    $region25: #{tpu_custom_call.1} parent=1 // pred_fallthru
      _
    // Predicated region
    $region26: #{tpu_custom_call.1} parent=1 // pred_check
      _
    $region27: #{tpu_custom_call.1} parent=1 // pred_check_branch
      %57 = sbr.rel (0) target = $region29
    $region28: #{tpu_custom_call.1} parent=1 // pred_region
      %58 = dma.done [#allocation8], 256
    $region29: #{tpu_custom_call.1} parent=1 // pred_fallthru
      _
    // Predicated region
    $region30: #{tpu_custom_call.1} parent=1 // pred_check
      _
    $region31: #{tpu_custom_call.1} parent=1 // pred_check_branch
      %60 = sbr.rel (0) target = $region33
    $region32: #{tpu_custom_call.1} parent=1 // pred_region
      %61 = dma.done [#allocation8], 256
    $region33: #{tpu_custom_call.1} parent=1 // pred_fallthru
      _
    %p62 = scmp.eq.s32.totalorder 0, 0
    %p63 = scmp.eq.s32.totalorder 0, 0
    %p64 = pnand %p62, %p63
    %p65 = pneg %p64
    // Predicated region
    $region34: #{tpu_custom_call.1} parent=1 // pred_check
      _
    $region35: #{tpu_custom_call.1} parent=1 // pred_check_branch
      %67 = sbr.rel (%p64) target = $region37
    $region36: #{tpu_custom_call.1} parent=1 // pred_region
      %vm68 = vcmask 130048
      %69 = vst.msk [vmem:[#allocation2] sm:$0xff] %vm68, 0.0
      %70 = vst.msk [vmem:[#allocation2 + $0x8] sm:$0xff] %vm68, 0.0
      %vm71 = vcmask 123904
      %72 = vst.msk [vmem:[#allocation3] sm:$0x3] %vm71, 0.0
    $region37: #{tpu_custom_call.1} parent=1 // pred_fallthru
      _
    %v73 = vld [vmem:[%s4] sm:$0x3]
    %v74 = vld [vmem:[%s3] sm:$0x3]
    %v75 = vld [vmem:[#allocation9] sm:$0xff]
    %v76 = vld [vmem:[#allocation9 + $0x8] sm:$0xff]
    %v77 = vld [vmem:[#allocation7] sm:$0xff]
    %v78 = vld [vmem:[#allocation7 + $0x8] sm:$0xff]
    %v79 = vld [vmem:[#allocation4] sm:$0xff]
    %v80 = vld [vmem:[#allocation4 + $0x8] sm:$0xff]
    %vm81 = vcmp.ne.f32.partialorder %v73, 0.0
    %v82 = vsel %vm81, 1, 0
    %v84 = vunpack.c.l.s4 1966171168
    %v85 = vunpack.c.0.s8 %v84
    %v86 = vlaneseq
    %v87 = vshrl.u32 %v86, 7
    %v88 = vsub.s32 %v85, %v87
    %v89 = vrot.slane %v82, %v88
    %v90 = vcombine.high %v89, %v89
    %v92 = vunpack.c.l.s4 1966171168
    %v93 = vunpack.c.0.s8 %v92
    %v94 = vlaneseq
    %v95 = vshrl.u32 %v94, 7
    %v96 = vsub.s32 %v93, %v95
    %v97 = vrot.slane %v89, %v96
    %v99 = vunpack.c.l.s4 1966171168
    %v100 = vunpack.c.0.s8 %v99
    %v101 = vlaneseq
    %v102 = vshrl.u32 %v101, 7
    %v103 = vsub.s32 %v100, %v102
    %v104 = vrot.slane %v90, %v103
    %vm105 = vcmp.ne.s32.totalorder %v97, 0
    %vm106 = vcmp.ne.s32.totalorder %v104, 0
    %v107 = vsel %vm105, 1, 0
    %v108 = vsel %vm106, 1, 0
    %v109 = vlaneseq
    %v110 = vshrl.u32 %v109, 7
    %v111 = vsub.s32 0, %v110
    %v112 = vrot.slane %v107, %v111
    %v113 = vlaneseq
    %v114 = vshrl.u32 %v113, 7
    %v115 = vsub.s32 0, %v114
    %v116 = vrot.slane %v108, %v115
    %vm117 = vcmp.eq.s32.totalorder %v112, 1
    %vm118 = vcmp.eq.s32.totalorder %v116, 1
    %v119 = vsel %vm117, %v77, 0.0
    %v120 = vsel %vm118, %v78, 0.0
    %v121 = vsub.f32 %v119, %v75
    %v122 = vsub.f32 %v120, %v76
    %v123 = vsel %vm117, %v79, 0.0
    %v124 = vsel %vm118, %v80, 0.0
    %v125 = vsub.f32 %v123, %v75
    %v126 = vsub.f32 %v124, %v76
    %v127 = vmul.f32 %v121, %v121
    %v128 = vmul.f32 %v122, %v122
    %v129 = vmul.f32 %v125, %v125
    %v130 = vmul.f32 %v126, %v126
    %v131 = vadd.f32 %v127, %v129
    %v132 = vadd.f32 %v128, %v130
    %v133 = vmax.f32 %v74, 0.0
    %v134 = vmul.f32 %v74, %v73
    %v135 = vsub.f32 %v133, %v134
    %v136 = vand.u32 2147483647, %v74
    %v137 = vsub.f32 0.0, %v136
    %v138 = vmul.f32 %v137, 1.442695
    %v139 = vpow.pop %v138
    %v140 = vadd.f32 %v139, 1.0
    %v141 = vlog2.pop %v140
    %v142 = vmul.f32 %v141, 0.6931472
    %v143 = vmul.f32 -0.5, %v139
    %v144 = vadd.f32 %v143, 1.0
    %v145 = vmul.f32 %v144, %v139
    %v146 = vand.u32 2147483647, %v139
    %vm147 = vcmp.lt.f32.partialorder %v146, 0.0004427343
    %v148 = vsel %vm147, %v145, %v142
    %v149 = vadd.f32 %v135, %v148
    %v150 = vld [vmem:[#allocation2] sm:$0xff]
    %v151 = vld [vmem:[#allocation2 + $0x8] sm:$0xff]
    %v152 = vadd.f32 %v150, %v131
    %v153 = vadd.f32 %v151, %v132
    %vm154 = vcmask 130048
    %155 = vst.msk [vmem:[#allocation2] sm:$0xff] %vm154, %v152
    %156 = vst.msk [vmem:[#allocation2 + $0x8] sm:$0xff] %vm154, %v153
    %v157 = vld [vmem:[#allocation3] sm:$0x3]
    %v158 = vadd.f32 %v157, %v149
    %vm159 = vcmask 123904
    %160 = vst.msk [vmem:[#allocation3] sm:$0x3] %vm159, %v158
    // Predicated region
    $region38: #{tpu_custom_call.1} parent=1 // pred_check
      _
    $region39: #{tpu_custom_call.1} parent=1 // pred_check_branch
      %162 = sbr.rel (%p64) target = $region41
    $region40: #{tpu_custom_call.1} parent=1 // pred_region
      %v163 = vld [vmem:[#allocation2] sm:$0xff]
      %v164 = vld [vmem:[#allocation2 + $0x8] sm:$0xff]
      %v165 = vsel %vm154, %v163, 0.0
      %v166 = vsel %vm154, %v164, 0.0
      %v167 = vadd.f32 %v165, %v166
      %168 = vadd.xlane.f32.xlu0 %v167
      %v169 = vpop.xlane.xlu0 %168
      %v170 = vrot.slane %v169, 4
      %v171 = vadd.f32 %v169, %v170
      %v172 = vrot.slane %v171, 2
      %v173 = vadd.f32 %v171, %v172
      %v174 = vrot.slane %v173, 1
      %v175 = vadd.f32 %v173, %v174
      %s176 = vtos %v175
      %s177 = smul.f32 %s176, 0.00390625
      %v178 = vld [vmem:[#allocation3] sm:$0x3]
      %v179 = vsel %vm159, %v178, 0.0
      %180 = vadd.xlane.f32.xlu0 %v179
      %v181 = vpop.xlane.xlu0 %180
      %v182 = vrot.slane %v181, 4
      %v183 = vadd.f32 %v181, %v182
      %v184 = vrot.slane %v183, 2
      %v185 = vadd.f32 %v183, %v184
      %v186 = vrot.slane %v185, 1
      %v187 = vadd.f32 %v185, %v186
      %s188 = vtos %v187
      %s189 = smul.f32 %s188, 0.03125
      %s190 = sadd.f32 %s177, %s189
      %v191 = vstv %s190
      %v192 = vadd.f32 %v191, 0.0
      %vm193 = vcmask 0
      %194 = vst.msk [vmem:[#allocation10] sm:$0x1] %vm193, %v192
    $region41: #{tpu_custom_call.1} parent=1 // pred_fallthru
      _
    // Predicated region
    $region42: #{tpu_custom_call.1} parent=1 // pred_check
      _
    $region43: #{tpu_custom_call.1} parent=1 // pred_check_branch
      %196 = sbr.rel (0) target = $region45
    $region44: #{tpu_custom_call.1} parent=1 // pred_region
      %s198 = ssub.s32 16, 16
      %199 = vsyncadd [#allocation6], %s198
      %s201 = sshll.u32 [#allocation10], 4
      %s202 = int_to_ptr.vmem [resolvable:$true] %s201
      %204 = dma.vmem_to_hbm [thread:$0]  %s202, 16, %s5, [#allocation6]
    $region45: #{tpu_custom_call.1} parent=1 // pred_fallthru
      _
    // Predicated region
    $region46: #{tpu_custom_call.1} parent=1 // pred_check
      _
    $region47: #{tpu_custom_call.1} parent=1 // pred_check_branch
      %206 = sbr.rel (0) target = $region49
    $region48: #{tpu_custom_call.1} parent=1 // pred_region
      %207 = dma.done [#allocation6], 16
    $region49: #{tpu_custom_call.1} parent=1 // pred_fallthru
      _
    %208 = vsyncpa [#allocation5], 1
    %209 = vsyncpa [#allocation8], 1
    %210 = vsyncpa [#allocation6], 1

</llo_original>
